<compile_context>
chip_gen: v6e
topology: v6e:2x2x1
jax: 0.10.0
libtpu: 0.0.40
codegen_flags: <defaults>
</compile_context>

<pallas_src>
import functools

import jax
import jax.numpy as jnp
from jax.experimental import pallas as pl
from jax.experimental.pallas import tpu as pltpu

_SOBEL_EPS = 1e-6              # kornia.sobel default eps
_OUT_SUBLANES = 8              # lane-dense partial-sum output tile
_OUT_LANES = 128

# Fixed lane layout of the packed per-block partial sums.
_LANE_L1_FINE = 0
_LANE_SOB_FINE = 1
_LANE_L1_COARSE = 2
_LANE_SOB_COARSE = 3
_LANE_ERR = 4


# -----------------------------------------------------------------------------
# Hardware-aware sizing
# -----------------------------------------------------------------------------
def _vmem_params():
    try:
        cap = int(pltpu.get_tpu_info().vmem_capacity_bytes)
    except Exception:
        cap = 64 * 1024 * 1024
    # per full-res input block budget: leave room for 3-4 double-buffered input
    # streams + ~8-12 live f32 full-block intermediates of the sobel pipeline.
    budget = max(cap // 64, 256 * 1024)
    vmem_limit = min((cap * 3) // 4, 96 * 1024 * 1024)
    return budget, vmem_limit


def _pick_block_images(bc, h, w, itemsize, budget):
    """Whole images per block: divisor of bc with (d*h) % 8 == 0 (or whole array),
    preferring >=2 blocks (DMA double-buffering + both TCs on v7x), an even
    block count, then the largest block that fits the VMEM budget."""
    cands = [d for d in range(1, bc + 1)
             if bc % d == 0 and ((d * h) % 8 == 0 or d == bc)]
    fitting = [d for d in cands if d * h * w * itemsize <= budget]
    pool = fitting if fitting else [min(cands)]
    # TODO(synk): when even one image per block exceeds the budget, a halo'd
    # row-strip tiling (1-row top/bottom halo DMA) is needed; blocks here must
    # cover whole images so the replicate-border masks stay block-local.

    def score(d):
        nblk = bc // d
        return (nblk >= 2, nblk % 2 == 0, d)

    return max(pool, key=score)


# -----------------------------------------------------------------------------
# pltpu.roll fast-path probe (per block shape & axis, cached)
# -----------------------------------------------------------------------------
_ROLL_PROBE_CACHE = {}


def _xlu_roll_ok(rows, cols, axis):
    """Probe (once per block shape & axis) whether pltpu.roll lowers and matches
    jnp.roll for the +/-1 shifts this kernel needs; otherwise fall back to the
    slice+concat jnp.roll path.  Keeps the XLU rotate on the fast path without
    risking a lowering failure on odd tile shapes."""
    if axis == 0 and rows % 8 != 0:
        return False
    if axis == 1 and cols % 128 != 0:
        return False
    key = (rows, cols, axis)
    if key not in _ROLL_PROBE_CACHE:
        try:
            size = (rows, cols)[axis]
            x = (jnp.arange(rows * cols, dtype=jnp.float32) * 1e-3).reshape(rows, cols)

            def probe(x_ref, o_ref):
                v = x_ref[...]
                o_ref[...] = (pltpu.roll(v, 1, axis)
                              + 2.0 * pltpu.roll(v, size - 1, axis))

            got = pl.pallas_call(
                probe, out_shape=jax.ShapeDtypeStruct((rows, cols), jnp.float32))(x)
            want = jnp.roll(x, 1, axis) + 2.0 * jnp.roll(x, -1, axis)
            _ROLL_PROBE_CACHE[key] = bool(jnp.allclose(got, want, rtol=0.0, atol=1e-6))
        except Exception:
            _ROLL_PROBE_CACHE[key] = False
    return _ROLL_PROBE_CACHE[key]


# -----------------------------------------------------------------------------
# In-kernel helpers
# -----------------------------------------------------------------------------
def _roll(x, shift, axis, use_xlu):
    """Wrap-shift along `axis`; XLU rotate on the probed fast path, jnp.roll
    (slice+concat) fallback otherwise.  Wrapped values at image borders are
    always overwritten by the replicate-border masks."""
    size = x.shape[axis]
    shift = shift % size
    if use_xlu[axis]:
        return pltpu.roll(x, shift, axis)
    return jnp.roll(x, shift, axis)


def _border_masks(rows, cols, img_h):
    """Replicate-border masks for a block of vertically packed (img_h, cols)
    images.  Avoids the per-element integer mod in the common cases."""
    row = jax.lax.broadcasted_iota(jnp.int32, (rows, cols), 0)
    col = jax.lax.broadcasted_iota(jnp.int32, (rows, cols), 1)
    if rows == img_h:                         # one image per block: no mod
        r = row
    elif (img_h & (img_h - 1)) == 0:          # power-of-two image height: AND
        r = jnp.bitwise_and(row, img_h - 1)
    else:
        r = row % img_h
    return r == 0, r == img_h - 1, col == 0, col == cols - 1


def _sobel_mag_unscaled(x, top, bot, left, right, use_xlu):
    """8x the kornia.sobel magnitude (replicate padding), separable form.
    The 1/8 normalization is folded into the per-block partial sum; eps is
    scaled by 64 accordingly: sqrt(Gx^2+Gy^2+64*eps) == 8*sqrt(gx^2+gy^2+eps)."""
    x_u = jnp.where(top, x, _roll(x, 1, 0, use_xlu))     # row r-1
    x_d = jnp.where(bot, x, _roll(x, -1, 0, use_xlu))    # row r+1
    x_l = jnp.where(left, x, _roll(x, 1, 1, use_xlu))    # col c-1
    x_r = jnp.where(right, x, _roll(x, -1, 1, use_xlu))  # col c+1

    v = x_u + 2.0 * x + x_d        # vertical [1,2,1] smooth (for gx)
    h = x_l + 2.0 * x + x_r        # horizontal [1,2,1] smooth (for gy)

    v_l = jnp.where(left, v, _roll(v, 1, 1, use_xlu))
    v_r = jnp.where(right, v, _roll(v, -1, 1, use_xlu))
    h_u = jnp.where(top, h, _roll(h, 1, 0, use_xlu))
    h_d = jnp.where(bot, h, _roll(h, -1, 0, use_xlu))

    gx = v_r - v_l
    gy = h_d - h_u
    return jnp.sqrt(gx * gx + gy * gy + 64.0 * _SOBEL_EPS)


# -----------------------------------------------------------------------------
# Fused Pallas kernel (one block = `tbc` whole images stacked along sublanes)
# -----------------------------------------------------------------------------
def _loss_kernel(*refs, img_h, has_coarse, has_err, in_kernel_up, use_xlu):
    it = iter(refs)
    p_ref = next(it)
    t_ref = next(it)
    c_ref = next(it) if has_coarse else None
    e_ref = next(it) if has_err else None
    mh_ref = next(it) if in_kernel_up else None
    mw_ref = next(it) if in_kernel_up else None
    out_ref = next(it)

    rows, cols = p_ref.shape
    p = p_ref[...].astype(jnp.float32)
    t = t_ref[...].astype(jnp.float32)

    if in_kernel_up:
        mh = mh_ref[...]
        mw = mw_ref[...]

    def load_lowres(ref):
        x = ref[...].astype(jnp.float32)
        if in_kernel_up:
            # bilinear upsample on the otherwise-idle MXU: sublanes then lanes.
            x = jnp.dot(mh, x, preferred_element_type=jnp.float32)
            x = jnp.dot(x, mw, preferred_element_type=jnp.float32)
        return x

    c = load_lowres(c_ref) if has_coarse else None
    e = load_lowres(e_ref) if has_err else None

    top, bot, left, right = _border_masks(rows, cols, img_h)
    mag_t = _sobel_mag_unscaled(t, top, bot, left, right, use_xlu)   # sobel(true) once
    mag_p = _sobel_mag_unscaled(p, top, bot, left, right, use_xlu)

    entries = [(_LANE_L1_FINE, jnp.sum(jnp.abs(p - t))),
               (_LANE_SOB_FINE, 0.125 * jnp.sum(jnp.abs(mag_p - mag_t)))]
    if has_coarse:
        mag_c = _sobel_mag_unscaled(c, top, bot, left, right, use_xlu)
        entries.append((_LANE_L1_COARSE, jnp.sum(jnp.abs(c - t))))
        entries.append((_LANE_SOB_COARSE, 0.125 * jnp.sum(jnp.abs(mag_c - mag_t))))
    if has_err:
        base = c if has_coarse else p
        # TODO(synk): forward-only; under jax.grad the |base - t| error target
        # needs a stop_gradient inside a custom_vjp around this pallas_call.
        entries.append((_LANE_ERR, jnp.sum(jnp.abs(e - jnp.abs(base - t)))))

    lane = jax.lax.broadcasted_iota(jnp.int32, (_OUT_SUBLANES, _OUT_LANES), 1)
    acc = jnp.zeros((_OUT_SUBLANES, _OUT_LANES), jnp.float32)
    for idx, s in entries:
        acc = acc + jnp.where(lane == idx, s, 0.0)
    out_ref[...] = acc.reshape(out_ref.shape)


# -----------------------------------------------------------------------------
# JAX wrappers
# -----------------------------------------------------------------------------
def _resize_bilinear(x, size):
    # F.interpolate(mode='bilinear', align_corners=False); for upsampling this
    # matches jax.image.resize('bilinear') (half-pixel centers).
    B, C = x.shape[:2]
    return jax.image.resize(x, (B, C) + tuple(size), method='bilinear')


def _upsample_matrices(hh, ww, H, W, tbc):
    """1-D bilinear interpolation operators matching jax.image.resize('bilinear')
    (== F.interpolate align_corners=False for upsampling), extracted by resizing
    identity matrices.  Mh is block-diagonal over the tbc images packed along
    sublanes within each block."""
    mh1 = jax.image.resize(jnp.eye(hh, dtype=jnp.float32), (H, hh), method='bilinear')
    mw = jax.image.resize(jnp.eye(ww, dtype=jnp.float32), (ww, W), method='bilinear')
    mh = jnp.kron(jnp.eye(tbc, dtype=jnp.float32), mh1)
    return mh, mw


def _pallas_losses(pred, true, coarse=None, err=None):
    """Single fused streaming pass over all loss terms.

    Returns a dict with 'main' (L1 + sobel-L1 of pred vs true), and optionally
    'coarse' (same for the upsampled coarse prediction, sharing sobel(true))
    and 'err' (L1 of upsampled pred_err vs |pred_pha - true|)."""
    B, C, H, W = true.shape
    bc = B * C
    budget, vmem_limit = _vmem_params()
    itemsize = max(pred.dtype.itemsize, true.dtype.itemsize)
    tbc = _pick_block_images(bc, H, W, itemsize, budget)
    nblk = bc // tbc
    rows = tbc * H

    has_coarse = coarse is not None
    has_err = err is not None

    p2 = pred.reshape(bc * H, W)
    t2 = true.reshape(bc * H, W)
    full_spec = pl.BlockSpec((rows, W), lambda i: (i, 0))

    # Decide whether the low-res tensors can be upsampled inside the kernel
    # (two MXU matmuls) instead of a full-res jax.image.resize HBM round-trip.
    low_shapes = []
    if has_coarse:
        low_shapes.append(tuple(coarse.shape[2:]))
    if has_err:
        low_shapes.append(tuple(err.shape[2:]))
    in_kernel_up = False
    if low_shapes and len(set(low_shapes)) == 1 and low_shapes[0] != (H, W):
        hh, ww = low_shapes[0]
        if (tbc * hh) % 8 == 0 or tbc == bc:
            in_kernel_up = True

    inputs = [p2, t2]
    in_specs = [full_spec, full_spec]

    if in_kernel_up:
        hh, ww = low_shapes[0]
        half_spec = pl.BlockSpec((tbc * hh, ww), lambda i: (i, 0))
        if has_coarse:
            inputs.append(coarse.reshape(bc * hh, ww))
            in_specs.append(half_spec)
        if has_err:
            inputs.append(err.reshape(bc * hh, ww))
            in_specs.append(half_spec)
        mh, mw = _upsample_matrices(hh, ww, H, W, tbc)
        inputs += [mh, mw]
        in_specs += [pl.BlockSpec(mh.shape, lambda i: (0, 0)),
                     pl.BlockSpec(mw.shape, lambda i: (0, 0))]
    else:
        if has_coarse:
            c_full = coarse if tuple(coarse.shape[2:]) == (H, W) else \
                _resize_bilinear(coarse, (H, W))
            inputs.append(c_full.reshape(bc * H, W))
            in_specs.append(full_spec)
        if has_err:
            e_full = err if tuple(err.shape[2:]) == (H, W) else \
                _resize_bilinear(err, (H, W))
            inputs.append(e_full.reshape(bc * H, W))
            in_specs.append(full_spec)

    use_xlu = (_xlu_roll_ok(rows, W, 0), _xlu_roll_ok(rows, W, 1))

    out_spec = pl.BlockSpec((1, _OUT_SUBLANES, _OUT_LANES), lambda i: (i, 0, 0))
    out_shape = jax.ShapeDtypeStruct((nblk, _OUT_SUBLANES, _OUT_LANES), jnp.float32)

    kernel = functools.partial(
        _loss_kernel, img_h=H, has_coarse=has_coarse, has_err=has_err,
        in_kernel_up=in_kernel_up, use_xlu=use_xlu)

    sums = pl.pallas_call(
        kernel,
        out_shape=out_shape,
        grid=(nblk,),
        in_specs=in_specs,
        out_specs=out_spec,
        compiler_params=pltpu.CompilerParams(
            dimension_semantics=("parallel",),     # no carried state: both TCs on v7x
            vmem_limit_bytes=vmem_limit),
    )(*inputs)

    n = jnp.float32(bc * H * W)
    res = {'main': (jnp.sum(sums[:, 0, _LANE_L1_FINE]) +
                    jnp.sum(sums[:, 0, _LANE_SOB_FINE])) / n}
    if has_coarse:
        res['coarse'] = (jnp.sum(sums[:, 0, _LANE_L1_COARSE]) +
                         jnp.sum(sums[:, 0, _LANE_SOB_COARSE])) / n
    if has_err:
        res['err'] = jnp.sum(sums[:, 0, _LANE_ERR]) / n
    return res


# -----------------------------------------------------------------------------
# matting_loss_2 equivalent
# -----------------------------------------------------------------------------
def matting_loss(pred_pha_fine, true_pha, pred_pha_corse=None, pred_err=None):
    # One fused streaming pass: sobel(true_pha) computed once, each full-res
    # tensor read from HBM once, coarse/err upsampled in-kernel when possible.
    # TODO(synk): forward-only; training under jax.grad needs a custom_vjp
    # around the pallas_call (incl. stop_gradient on the err target).
    r = _pallas_losses(pred_pha_fine, true_pha, pred_pha_corse, pred_err)
    lossD = {'main_loss': r['main']}
    if pred_pha_corse is not None:
        lossD['coarse_pred_loss'] = r['coarse']
    if pred_err is not None:
        lossD['pred_err_loss'] = r['err']
    return lossD


class MattingRefineLossPallas:
    """Mirror of MattingRefineLoss.forward (no learnable parameters)."""

    def __init__(self, global_dict, MattingRefine_model,
                 pred_err_after_e=4, refine_after_e=15):
        self.global_dict = global_dict
        self.model = MattingRefine_model
        MattingRefine_model.do_refine = False
        self.pred_err_after_e = pred_err_after_e
        self.refine_after_e = refine_after_e

    def __call__(self, result, true_pha):
        # TODO(synk): epoch bookkeeping / do_refine flag mutation is host-side
        # Python control flow, not kernel work.
        trainer = self.global_dict['trainer']
        t = trainer.epoch_idx
        if self.model.do_refine:
            return matting_loss(result['pred'], true_pha,
                                result['coarse_pred'], result['pred_err'])
        else:
            if t >= self.refine_after_e:
                self.model.do_refine = True
            if t < self.pred_err_after_e:
                return matting_loss(result['pred'], true_pha)
            else:
                return matting_loss(result['pred'], true_pha,
                                    pred_err=result['pred_err'])


# -----------------------------------------------------------------------------
# Pure-JAX reference (for correctness checks only)
# -----------------------------------------------------------------------------
def _ref_sobel(x):
    B, C, H, W = x.shape
    xp = jnp.pad(x, ((0, 0), (0, 0), (1, 1), (1, 1)), mode='edge')
    kx = jnp.array([[-1., 0., 1.], [-2., 0., 2.], [-1., 0., 1.]], jnp.float32) / 8.0
    ky = kx.T
    gx = sum(kx[a, b] * xp[:, :, a:a + H, b:b + W]
             for a in range(3) for b in range(3))
    gy = sum(ky[a, b] * xp[:, :, a:a + H, b:b + W]
             for a in range(3) for b in range(3))
    return jnp.sqrt(gx * gx + gy * gy + _SOBEL_EPS)


def _ref_main_loss(pred, true):
    return (jnp.mean(jnp.abs(pred - true)) +
            jnp.mean(jnp.abs(_ref_sobel(pred) - _ref_sobel(true))))


# -----------------------------------------------------------------------------
# main
# -----------------------------------------------------------------------------
if __name__ == "__main__":
    key = jax.random.PRNGKey(0)
    ks = jax.random.split(key, 8)

    class _Trainer:
        epoch_idx = 0

    class _Model:
        pass

    # --- Shape A: lane-aligned (W % 128 == 0), multi-block grid (nblk=2, tbc=2):
    #     exercises the pltpu.roll fast path, packed (tbc>1) border masks, the
    #     fused refine kernel and the in-kernel MXU upsample. ---
    B, C, H, W = 4, 1, 16, 128
    true_a = jax.random.uniform(ks[0], (B, C, H, W), jnp.float32)
    pred_a = jax.random.uniform(ks[1], (B, C, H, W), jnp.float32)
    coarse_a = jax.random.uniform(ks[2], (B, C, H // 2, W // 2), jnp.float32)
    err_a = jax.random.uniform(ks[3], (B, C, H // 2, W // 2), jnp.float32)
    result_a = {'pred': pred_a, 'coarse_pred': coarse_a, 'pred_err': err_a}

    trainer_a = _Trainer()
    loss_a = MattingRefineLossPallas({'trainer': trainer_a}, _Model())

    trainer_a.epoch_idx = 0
    d0 = loss_a(result_a, true_a)            # main only
    trainer_a.epoch_idx = 5
    d1 = loss_a(result_a, true_a)            # main + err (in-kernel upsample)
    trainer_a.epoch_idx = 20
    _ = loss_a(result_a, true_a)             # flips do_refine
    d2 = loss_a(result_a, true_a)            # fused refine: main + coarse + err

    # --- Shape B: unaligned lanes (W=16) -> jnp.roll fallback for lane rolls;
    #     pred_err already full-resolution -> no-upsample err path. ---
    B2, C2, H2, W2 = 2, 1, 16, 16
    true_b = jax.random.uniform(ks[4], (B2, C2, H2, W2), jnp.float32)
    pred_b = jax.random.uniform(ks[5], (B2, C2, H2, W2), jnp.float32)
    err_b = jax.random.uniform(ks[6], (B2, C2, H2, W2), jnp.float32)
    result_b = {'pred': pred_b, 'coarse_pred': None, 'pred_err': err_b}

    trainer_b = _Trainer()
    loss_b = MattingRefineLossPallas({'trainer': trainer_b}, _Model())
    trainer_b.epoch_idx = 0
    e0 = loss_b(result_b, true_b)            # main only (roll fallback path)
    trainer_b.epoch_idx = 5
    e1 = loss_b(result_b, true_b)            # main + full-res err

    for d in (d0, d1, d2, e0, e1):
        for v in d.values():
            jax.block_until_ready(v)

    # --- correctness vs a pure-JAX reference of matting_loss_2 ---
    ref_main_a = _ref_main_loss(pred_a, true_a)
    assert jnp.allclose(d0['main_loss'], ref_main_a, rtol=1e-5, atol=1e-5), (
        d0['main_loss'], ref_main_a)
    assert jnp.allclose(d1['main_loss'], ref_main_a, rtol=1e-5, atol=1e-5)
    assert jnp.allclose(d2['main_loss'], ref_main_a, rtol=1e-5, atol=1e-5)

    err_a_up = _resize_bilinear(err_a, (H, W))
    ref_err_fine = jnp.mean(jnp.abs(err_a_up - jnp.abs(pred_a - true_a)))
    assert jnp.allclose(d1['pred_err_loss'], ref_err_fine, rtol=1e-5, atol=1e-5)

    coarse_a_up = _resize_bilinear(coarse_a, (H, W))
    ref_coarse = _ref_main_loss(coarse_a_up, true_a)
    assert jnp.allclose(d2['coarse_pred_loss'], ref_coarse, rtol=1e-5, atol=1e-5)
    ref_err_refine = jnp.mean(jnp.abs(err_a_up - jnp.abs(coarse_a_up - true_a)))
    assert jnp.allclose(d2['pred_err_loss'], ref_err_refine, rtol=1e-5, atol=1e-5)

    ref_main_b = _ref_main_loss(pred_b, true_b)
    assert jnp.allclose(e0['main_loss'], ref_main_b, rtol=1e-5, atol=1e-5)
    assert jnp.allclose(e1['main_loss'], ref_main_b, rtol=1e-5, atol=1e-5)
    ref_err_b = jnp.mean(jnp.abs(err_b - jnp.abs(pred_b - true_b)))
    assert jnp.allclose(e1['pred_err_loss'], ref_err_b, rtol=1e-5, atol=1e-5)

    print("KERNEL_OK")
</pallas_src>

<mosaic_0001>
module attributes {stable_mosaic.version = 11 : i64} {
  func.func @probe(%arg0: memref<32x128xf32, #tpu.memory_space<vmem>>, %arg1: memref<32x128xf32, #tpu.memory_space<vmem>>) attributes {dimension_semantics = [], scalar_prefetch = 0 : i64, scratch_operands = 0 : i64, tpu.core_type = #tpu.core_type<tc>} {
    %c0 = arith.constant 0 : index
    %c0_0 = arith.constant 0 : index
    %0 = vector.load %arg0[%c0, %c0_0] : memref<32x128xf32, #tpu.memory_space<vmem>>, vector<32x128xf32>
    %c1_i32 = arith.constant 1 : i32
    %1 = tpu.dynamic_rotate %0 by %c1_i32 dim 0 : vector<32x128xf32>, i32 -> vector<32x128xf32>
    %c31_i32 = arith.constant 31 : i32
    %2 = tpu.dynamic_rotate %0 by %c31_i32 dim 0 : vector<32x128xf32>, i32 -> vector<32x128xf32>
    %cst = arith.constant 2.000000e+00 : f32
    %3 = vector.broadcast %cst : f32 to vector<32x128xf32>
    %4 = arith.mulf %3, %2 : vector<32x128xf32>
    %5 = arith.addf %1, %4 : vector<32x128xf32>
    %c0_1 = arith.constant 0 : index
    %c0_2 = arith.constant 0 : index
    %6 = vector.load %arg1[%c0_1, %c0_2] : memref<32x128xf32, #tpu.memory_space<vmem>>, vector<32x128xf32>
    tpu.vector_store %arg1[%c0_1, %c0_2], %5 {strides = array<i32>} : memref<32x128xf32, #tpu.memory_space<vmem>>, vector<32x128xf32>,
    return
  }
}

module attributes {stable_mosaic.version = 11 : i64} {
  func.func @probe(%arg0: memref<32x128xf32, #tpu.memory_space<vmem>>, %arg1: memref<32x128xf32, #tpu.memory_space<vmem>>) attributes {dimension_semantics = [], scalar_prefetch = 0 : i64, scratch_operands = 0 : i64, tpu.core_type = #tpu.core_type<tc>} {
    %c0 = arith.constant 0 : index
    %c0_0 = arith.constant 0 : index
    %0 = vector.load %arg0[%c0, %c0_0] : memref<32x128xf32, #tpu.memory_space<vmem>>, vector<32x128xf32>
    %c1_i32 = arith.constant 1 : i32
    %1 = tpu.dynamic_rotate %0 by %c1_i32 dim 1 : vector<32x128xf32>, i32 -> vector<32x128xf32>
    %c127_i32 = arith.constant 127 : i32
    %2 = tpu.dynamic_rotate %0 by %c127_i32 dim 1 : vector<32x128xf32>, i32 -> vector<32x128xf32>
    %cst = arith.constant 2.000000e+00 : f32
    %3 = vector.broadcast %cst : f32 to vector<32x128xf32>
    %4 = arith.mulf %3, %2 : vector<32x128xf32>
    %5 = arith.addf %1, %4 : vector<32x128xf32>
    %c0_1 = arith.constant 0 : index
    %c0_2 = arith.constant 0 : index
    %6 = vector.load %arg1[%c0_1, %c0_2] : memref<32x128xf32, #tpu.memory_space<vmem>>, vector<32x128xf32>
    tpu.vector_store %arg1[%c0_1, %c0_2], %5 {strides = array<i32>} : memref<32x128xf32, #tpu.memory_space<vmem>>, vector<32x128xf32>,
    return
  }
}

module attributes {stable_mosaic.version = 11 : i64} {
  func.func @_loss_kernel(%arg0: i32, %arg1: memref<32x128xf32, #tpu.memory_space<vmem>>, %arg2: memref<32x128xf32, #tpu.memory_space<vmem>>, %arg3: memref<1x8x128xf32, #tpu.memory_space<vmem>>) attributes {dimension_semantics = [#tpu.dimension_semantics<parallel>], iteration_bounds = array<i64: 2>, scalar_prefetch = 0 : i64, scratch_operands = 0 : i64, tpu.core_type = #tpu.core_type<tc>, window_params = [{transform_indices = @transform_0, window_bounds = array<i64: 32, 128>}, {transform_indices = @transform_1, window_bounds = array<i64: 32, 128>}, {transform_indices = @transform_2, window_bounds = array<i64: 1, 8, 128>}]} {
    %c0 = arith.constant 0 : index
    %c0_0 = arith.constant 0 : index
    %0 = vector.load %arg1[%c0, %c0_0] : memref<32x128xf32, #tpu.memory_space<vmem>>, vector<32x128xf32>
    %c0_1 = arith.constant 0 : index
    %c0_2 = arith.constant 0 : index
    %1 = vector.load %arg2[%c0_1, %c0_2] : memref<32x128xf32, #tpu.memory_space<vmem>>, vector<32x128xf32>
    %2 = tpu.iota {dimensions = array<i32: 0>} : vector<32x128xi32>
    %3 = tpu.iota {dimensions = array<i32: 1>} : vector<32x128xi32>
    %c15_i32 = arith.constant 15 : i32
    %4 = vector.broadcast %c15_i32 : i32 to vector<32x128xi32>
    %5 = arith.andi %2, %4 : vector<32x128xi32>
    %c0_i32 = arith.constant 0 : i32
    %6 = vector.broadcast %c0_i32 : i32 to vector<32x128xi32>
    %7 = arith.cmpi eq, %5, %6 : vector<32x128xi32>
    %c15_i32_3 = arith.constant 15 : i32
    %8 = vector.broadcast %c15_i32_3 : i32 to vector<32x128xi32>
    %9 = arith.cmpi eq, %5, %8 : vector<32x128xi32>
    %c0_i32_4 = arith.constant 0 : i32
    %10 = vector.broadcast %c0_i32_4 : i32 to vector<32x128xi32>
    %11 = arith.cmpi eq, %3, %10 : vector<32x128xi32>
    %c127_i32 = arith.constant 127 : i32
    %12 = vector.broadcast %c127_i32 : i32 to vector<32x128xi32>
    %13 = arith.cmpi eq, %3, %12 : vector<32x128xi32>
    %14 = vector.extract_strided_slice %1 {offsets = [31, 0], sizes = [1, 128], strides = [1, 1]} : vector<32x128xf32> to vector<1x128xf32>
    %15 = vector.extract_strided_slice %1 {offsets = [0, 0], sizes = [31, 128], strides = [1, 1]} : vector<32x128xf32> to vector<31x128xf32>
    %16 = tpu.concatenate %14, %15 in 0 : vector<1x128xf32>, vector<31x128xf32> -> vector<32x128xf32>
    %17 = arith.select %7, %1, %16 : vector<32x128xi1>, vector<32x128xf32>
    %18 = vector.extract_strided_slice %1 {offsets = [1, 0], sizes = [31, 128], strides = [1, 1]} : vector<32x128xf32> to vector<31x128xf32>
    %19 = vector.extract_strided_slice %1 {offsets = [0, 0], sizes = [1, 128], strides = [1, 1]} : vector<32x128xf32> to vector<1x128xf32>
    %20 = tpu.concatenate %18, %19 in 0 : vector<31x128xf32>, vector<1x128xf32> -> vector<32x128xf32>
    %21 = arith.select %9, %1, %20 : vector<32x128xi1>, vector<32x128xf32>
    %22 = vector.extract_strided_slice %1 {offsets = [0, 127], sizes = [32, 1], strides = [1, 1]} : vector<32x128xf32> to vector<32x1xf32>
    %23 = vector.extract_strided_slice %1 {offsets = [0, 0], sizes = [32, 127], strides = [1, 1]} : vector<32x128xf32> to vector<32x127xf32>
    %24 = tpu.concatenate %22, %23 in 1 : vector<32x1xf32>, vector<32x127xf32> -> vector<32x128xf32>
    %25 = arith.select %11, %1, %24 : vector<32x128xi1>, vector<32x128xf32>
    %26 = vector.extract_strided_slice %1 {offsets = [0, 1], sizes = [32, 127], strides = [1, 1]} : vector<32x128xf32> to vector<32x127xf32>
    %27 = vector.extract_strided_slice %1 {offsets = [0, 0], sizes = [32, 1], strides = [1, 1]} : vector<32x128xf32> to vector<32x1xf32>
    %28 = tpu.concatenate %26, %27 in 1 : vector<32x127xf32>, vector<32x1xf32> -> vector<32x128xf32>
    %29 = arith.select %13, %1, %28 : vector<32x128xi1>, vector<32x128xf32>
    %cst = arith.constant 2.000000e+00 : f32
    %30 = vector.broadcast %cst : f32 to vector<32x128xf32>
    %31 = arith.mulf %30, %1 : vector<32x128xf32>
    %32 = arith.addf %17, %31 : vector<32x128xf32>
    %33 = arith.addf %32, %21 : vector<32x128xf32>
    %cst_5 = arith.constant 2.000000e+00 : f32
    %34 = vector.broadcast %cst_5 : f32 to vector<32x128xf32>
    %35 = arith.mulf %34, %1 : vector<32x128xf32>
    %36 = arith.addf %25, %35 : vector<32x128xf32>
    %37 = arith.addf %36, %29 : vector<32x128xf32>
    %38 = vector.extract_strided_slice %33 {offsets = [0, 127], sizes = [32, 1], strides = [1, 1]} : vector<32x128xf32> to vector<32x1xf32>
    %39 = vector.extract_strided_slice %33 {offsets = [0, 0], sizes = [32, 127], strides = [1, 1]} : vector<32x128xf32> to vector<32x127xf32>
    %40 = tpu.concatenate %38, %39 in 1 : vector<32x1xf32>, vector<32x127xf32> -> vector<32x128xf32>
    %41 = arith.select %11, %33, %40 : vector<32x128xi1>, vector<32x128xf32>
    %42 = vector.extract_strided_slice %33 {offsets = [0, 1], sizes = [32, 127], strides = [1, 1]} : vector<32x128xf32> to vector<32x127xf32>
    %43 = vector.extract_strided_slice %33 {offsets = [0, 0], sizes = [32, 1], strides = [1, 1]} : vector<32x128xf32> to vector<32x1xf32>
    %44 = tpu.concatenate %42, %43 in 1 : vector<32x127xf32>, vector<32x1xf32> -> vector<32x128xf32>
    %45 = arith.select %13, %33, %44 : vector<32x128xi1>, vector<32x128xf32>
    %46 = vector.extract_strided_slice %37 {offsets = [31, 0], sizes = [1, 128], strides = [1, 1]} : vector<32x128xf32> to vector<1x128xf32>
    %47 = vector.extract_strided_slice %37 {offsets = [0, 0], sizes = [31, 128], strides = [1, 1]} : vector<32x128xf32> to vector<31x128xf32>
    %48 = tpu.concatenate %46, %47 in 0 : vector<1x128xf32>, vector<31x128xf32> -> vector<32x128xf32>
    %49 = arith.select %7, %37, %48 : vector<32x128xi1>, vector<32x128xf32>
    %50 = vector.extract_strided_slice %37 {offsets = [1, 0], sizes = [31, 128], strides = [1, 1]} : vector<32x128xf32> to vector<31x128xf32>
    %51 = vector.extract_strided_slice %37 {offsets = [0, 0], sizes = [1, 128], strides = [1, 1]} : vector<32x128xf32> to vector<1x128xf32>
    %52 = tpu.concatenate %50, %51 in 0 : vector<31x128xf32>, vector<1x128xf32> -> vector<32x128xf32>
    %53 = arith.select %9, %37, %52 : vector<32x128xi1>, vector<32x128xf32>
    %54 = arith.subf %45, %41 : vector<32x128xf32>
    %55 = arith.subf %53, %49 : vector<32x128xf32>
    %56 = arith.mulf %54, %54 : vector<32x128xf32>
    %57 = arith.mulf %55, %55 : vector<32x128xf32>
    %58 = arith.addf %56, %57 : vector<32x128xf32>
    %cst_6 = arith.constant 6.400000e-05 : f32
    %59 = vector.broadcast %cst_6 : f32 to vector<32x128xf32>
    %60 = arith.addf %58, %59 : vector<32x128xf32>
    %61 = math.sqrt %60 : vector<32x128xf32>
    %62 = vector.extract_strided_slice %0 {offsets = [31, 0], sizes = [1, 128], strides = [1, 1]} : vector<32x128xf32> to vector<1x128xf32>
    %63 = vector.extract_strided_slice %0 {offsets = [0, 0], sizes = [31, 128], strides = [1, 1]} : vector<32x128xf32> to vector<31x128xf32>
    %64 = tpu.concatenate %62, %63 in 0 : vector<1x128xf32>, vector<31x128xf32> -> vector<32x128xf32>
    %65 = arith.select %7, %0, %64 : vector<32x128xi1>, vector<32x128xf32>
    %66 = vector.extract_strided_slice %0 {offsets = [1, 0], sizes = [31, 128], strides = [1, 1]} : vector<32x128xf32> to vector<31x128xf32>
    %67 = vector.extract_strided_slice %0 {offsets = [0, 0], sizes = [1, 128], strides = [1, 1]} : vector<32x128xf32> to vector<1x128xf32>
    %68 = tpu.concatenate %66, %67 in 0 : vector<31x128xf32>, vector<1x128xf32> -> vector<32x128xf32>
    %69 = arith.select %9, %0, %68 : vector<32x128xi1>, vector<32x128xf32>
    %70 = vector.extract_strided_slice %0 {offsets = [0, 127], sizes = [32, 1], strides = [1, 1]} : vector<32x128xf32> to vector<32x1xf32>
    %71 = vector.extract_strided_slice %0 {offsets = [0, 0], sizes = [32, 127], strides = [1, 1]} : vector<32x128xf32> to vector<32x127xf32>
    %72 = tpu.concatenate %70, %71 in 1 : vector<32x1xf32>, vector<32x127xf32> -> vector<32x128xf32>
    %73 = arith.select %11, %0, %72 : vector<32x128xi1>, vector<32x128xf32>
    %74 = vector.extract_strided_slice %0 {offsets = [0, 1], sizes = [32, 127], strides = [1, 1]} : vector<32x128xf32> to vector<32x127xf32>
    %75 = vector.extract_strided_slice %0 {offsets = [0, 0], sizes = [32, 1], strides = [1, 1]} : vector<32x128xf32> to vector<32x1xf32>
    %76 = tpu.concatenate %74, %75 in 1 : vector<32x127xf32>, vector<32x1xf32> -> vector<32x128xf32>
    %77 = arith.select %13, %0, %76 : vector<32x128xi1>, vector<32x128xf32>
    %cst_7 = arith.constant 2.000000e+00 : f32
    %78 = vector.broadcast %cst_7 : f32 to vector<32x128xf32>
    %79 = arith.mulf %78, %0 : vector<32x128xf32>
    %80 = arith.addf %65, %79 : vector<32x128xf32>
    %81 = arith.addf %80, %69 : vector<32x128xf32>
    %cst_8 = arith.constant 2.000000e+00 : f32
    %82 = vector.broadcast %cst_8 : f32 to vector<32x128xf32>
    %83 = arith.mulf %82, %0 : vector<32x128xf32>
    %84 = arith.addf %73, %83 : vector<32x128xf32>
    %85 = arith.addf %84, %77 : vector<32x128xf32>
    %86 = vector.extract_strided_slice %81 {offsets = [0, 127], sizes = [32, 1], strides = [1, 1]} : vector<32x128xf32> to vector<32x1xf32>
    %87 = vector.extract_strided_slice %81 {offsets = [0, 0], sizes = [32, 127], strides = [1, 1]} : vector<32x128xf32> to vector<32x127xf32>
    %88 = tpu.concatenate %86, %87 in 1 : vector<32x1xf32>, vector<32x127xf32> -> vector<32x128xf32>
    %89 = arith.select %11, %81, %88 : vector<32x128xi1>, vector<32x128xf32>
    %90 = vector.extract_strided_slice %81 {offsets = [0, 1], sizes = [32, 127], strides = [1, 1]} : vector<32x128xf32> to vector<32x127xf32>
    %91 = vector.extract_strided_slice %81 {offsets = [0, 0], sizes = [32, 1], strides = [1, 1]} : vector<32x128xf32> to vector<32x1xf32>
    %92 = tpu.concatenate %90, %91 in 1 : vector<32x127xf32>, vector<32x1xf32> -> vector<32x128xf32>
    %93 = arith.select %13, %81, %92 : vector<32x128xi1>, vector<32x128xf32>
    %94 = vector.extract_strided_slice %85 {offsets = [31, 0], sizes = [1, 128], strides = [1, 1]} : vector<32x128xf32> to vector<1x128xf32>
    %95 = vector.extract_strided_slice %85 {offsets = [0, 0], sizes = [31, 128], strides = [1, 1]} : vector<32x128xf32> to vector<31x128xf32>
    %96 = tpu.concatenate %94, %95 in 0 : vector<1x128xf32>, vector<31x128xf32> -> vector<32x128xf32>
    %97 = arith.select %7, %85, %96 : vector<32x128xi1>, vector<32x128xf32>
    %98 = vector.extract_strided_slice %85 {offsets = [1, 0], sizes = [31, 128], strides = [1, 1]} : vector<32x128xf32> to vector<31x128xf32>
    %99 = vector.extract_strided_slice %85 {offsets = [0, 0], sizes = [1, 128], strides = [1, 1]} : vector<32x128xf32> to vector<1x128xf32>
    %100 = tpu.concatenate %98, %99 in 0 : vector<31x128xf32>, vector<1x128xf32> -> vector<32x128xf32>
    %101 = arith.select %9, %85, %100 : vector<32x128xi1>, vector<32x128xf32>
    %102 = arith.subf %93, %89 : vector<32x128xf32>
    %103 = arith.subf %101, %97 : vector<32x128xf32>
    %104 = arith.mulf %102, %102 : vector<32x128xf32>
    %105 = arith.mulf %103, %103 : vector<32x128xf32>
    %106 = arith.addf %104, %105 : vector<32x128xf32>
    %cst_9 = arith.constant 6.400000e-05 : f32
    %107 = vector.broadcast %cst_9 : f32 to vector<32x128xf32>
    %108 = arith.addf %106, %107 : vector<32x128xf32>
    %109 = math.sqrt %108 : vector<32x128xf32>
    %110 = arith.subf %0, %1 : vector<32x128xf32>
    %111 = math.absf %110 : vector<32x128xf32>
    %112 = vector.shape_cast %111 : vector<32x128xf32> to vector<1x32x128xf32>
    %cst_10 = arith.constant dense<0.000000e+00> : vector<1xf32>
    %113 = vector.multi_reduction <add>, %112, %cst_10 [1, 2] : vector<1x32x128xf32> to vector<1xf32>
    %114 = vector.shape_cast %113 : vector<1xf32> to vector<1x1x1xf32>
    %115 = vector.extract %114[0, 0, 0] : f32 from vector<1x1x1xf32>
    %116 = arith.subf %109, %61 : vector<32x128xf32>
    %117 = math.absf %116 : vector<32x128xf32>
    %118 = vector.shape_cast %117 : vector<32x128xf32> to vector<1x32x128xf32>
    %cst_11 = arith.constant dense<0.000000e+00> : vector<1xf32>
    %119 = vector.multi_reduction <add>, %118, %cst_11 [1, 2] : vector<1x32x128xf32> to vector<1xf32>
    %120 = vector.shape_cast %119 : vector<1xf32> to vector<1x1x1xf32>
    %121 = vector.extract %120[0, 0, 0] : f32 from vector<1x1x1xf32>
    %cst_12 = arith.constant 1.250000e-01 : f32
    %122 = arith.mulf %cst_12, %121 : f32
    %123 = tpu.iota {dimensions = array<i32: 1>} : vector<8x128xi32>
    %cst_13 = arith.constant 0.000000e+00 : f32
    %124 = vector.broadcast %cst_13 : f32 to vector<8x128xf32>
    %c0_i32_14 = arith.constant 0 : i32
    %125 = vector.broadcast %c0_i32_14 : i32 to vector<8x128xi32>
    %126 = arith.cmpi eq, %123, %125 : vector<8x128xi32>
    %cst_15 = arith.constant 0.000000e+00 : f32
    %127 = vector.broadcast %115 : f32 to vector<8x128xf32>
    %128 = vector.broadcast %cst_15 : f32 to vector<8x128xf32>
    %129 = arith.select %126, %127, %128 : vector<8x128xi1>, vector<8x128xf32>
    %130 = arith.addf %124, %129 : vector<8x128xf32>
    %c1_i32 = arith.constant 1 : i32
    %131 = vector.broadcast %c1_i32 : i32 to vector<8x128xi32>
    %132 = arith.cmpi eq, %123, %131 : vector<8x128xi32>
    %cst_16 = arith.constant 0.000000e+00 : f32
    %133 = vector.broadcast %122 : f32 to vector<8x128xf32>
    %134 = vector.broadcast %cst_16 : f32 to vector<8x128xf32>
    %135 = arith.select %132, %133, %134 : vector<8x128xi1>, vector<8x128xf32>
    %136 = arith.addf %130, %135 : vector<8x128xf32>
    %137 = vector.shape_cast %136 : vector<8x128xf32> to vector<1x8x128xf32>
    %c0_17 = arith.constant 0 : index
    %c0_18 = arith.constant 0 : index
    %c0_19 = arith.constant 0 : index
    %138 = vector.load %arg3[%c0_17, %c0_18, %c0_19] : memref<1x8x128xf32, #tpu.memory_space<vmem>>, vector<1x8x128xf32>
    tpu.vector_store %arg3[%c0_17, %c0_18, %c0_19], %137 {strides = array<i32>} : memref<1x8x128xf32, #tpu.memory_space<vmem>>, vector<1x8x128xf32>,
    return
  }
  func.func @transform_0(%arg0: i32) -> (i32, i32) {
    %c0_i32 = arith.constant 0 : i32
    %c0_i32_0 = arith.constant 0 : i32
    return %arg0, %c0_i32 : i32, i32
  }
  func.func @transform_1(%arg0: i32) -> (i32, i32) {
    %c0_i32 = arith.constant 0 : i32
    %c0_i32_0 = arith.constant 0 : i32
    return %arg0, %c0_i32 : i32, i32
  }
  func.func @transform_2(%arg0: i32) -> (i32, i32, i32) {
    %c0_i32 = arith.constant 0 : i32
    %c0_i32_0 = arith.constant 0 : i32
    %c0_i32_1 = arith.constant 0 : i32
    return %arg0, %c0_i32, %c0_i32_0 : i32, i32, i32
  }
}

</mosaic_0001>

<llo_original>
// kernel: tpu_custom_call.1
$region0: #{tpu_custom_call.1}
  #allocation0 [shape = 'u32[]', space=smem, size = 0x4, offset = 0x4, fixed_abs, tag = 'smem constant byte address 0x4 - core index']
  #allocation1 [shape = 'u32[144,128]{1,0:T(1,128)}', space=vmem, size = 0x12000, scoped, tag = 'internal scratch']
  %s0 = inlined_call_operand.hbm [shape: f32[32,128], index: 0, kind: input, shape index: {}]
  %s1 = inlined_call_operand.hbm [shape: f32[32,128], index: 1, kind: output, shape index: {}]
  %s2 = sld [smem:[#allocation0]]
  $region18: #{tpu_custom_call.1} parent=0
    _
  %s4 = ssub.s32 1, %s2
  %s5 = scalar_select 0, %s4, %s2
  $region1: #{tpu_custom_call.1} parent=0
    #allocation2 [shape = 'u8[16384]{0}', space=vmem, size = 0x4000, scoped, tag = 'input window, operand 0, single buffered']
    #allocation3 [shape = 's32[1]{0}', space=sflag, size = 0x4, scoped, tag = 'scoped memory for tpu_custom_call.1']
    #allocation4 [shape = 's32[1]{0}', space=sflag, size = 0x4, scoped, tag = 'scoped memory for tpu_custom_call.1']
    #allocation5 [shape = 'u8[16384]{0}', space=vmem, size = 0x4000, scoped, tag = 'output window, operand 0, single buffered']
    %6 = vsyncpa [#allocation3], 0
    %7 = vsyncpa [#allocation4], 0
    // Predicated region
    $region2: #{tpu_custom_call.1} parent=1 // pred_check
      _
    $region3: #{tpu_custom_call.1} parent=1 // pred_check_branch
      %9 = sbr.rel (0) target = $region5
    $region4: #{tpu_custom_call.1} parent=1 // pred_region
      %s11 = ssub.s32 512, 512
      %12 = vsyncadd [#allocation3], %s11
      %s13 = sshll.u32 [#allocation2], 4
      %s14 = int_to_ptr.vmem [resolvable:$true] %s13
      %19 = dma.hbm_to_vmem [thread:$0]  %s0, 512, %s14, [#allocation3], 128, 128, 8
    $region5: #{tpu_custom_call.1} parent=1 // pred_fallthru
      _
    // Predicated region
    $region6: #{tpu_custom_call.1} parent=1 // pred_check
      _
    $region7: #{tpu_custom_call.1} parent=1 // pred_check_branch
      %21 = sbr.rel (0) target = $region9
    $region8: #{tpu_custom_call.1} parent=1 // pred_region
      %22 = dma.done [#allocation3], 512
    $region9: #{tpu_custom_call.1} parent=1 // pred_fallthru
      _
    %v23 = vld [vmem:[#allocation2] sm:$0xff]
    %v24 = vld [vmem:[#allocation2 + $0x8] sm:$0xff]
    %v25 = vld [vmem:[#allocation2 + $0x10] sm:$0xff]
    %v26 = vld [vmem:[#allocation2 + $0x18] sm:$0xff]
    %v27 = vrot.slane %v23, 7
    %v28 = vrot.slane %v24, 7
    %v29 = vrot.slane %v25, 7
    %v30 = vrot.slane %v26, 7
    %v31 = vlaneseq
    %v32 = vshrl.u32 %v31, 7
    %vm33 = vcmp.lt.s32.totalorder %v32, 1
    %v34 = vsel %vm33, %v29, %v30
    %v35 = vsel %vm33, %v28, %v29
    %v36 = vsel %vm33, %v27, %v28
    %v37 = vsel %vm33, %v30, %v27
    %v38 = vrot.slane %v23, 1
    %v39 = vrot.slane %v24, 1
    %v40 = vrot.slane %v25, 1
    %v41 = vrot.slane %v26, 1
    %vm42 = vcmp.lt.s32.totalorder %v32, 7
    %v43 = vsel %vm42, %v40, %v41
    %v44 = vsel %vm42, %v39, %v40
    %v45 = vsel %vm42, %v38, %v39
    %v46 = vsel %vm42, %v41, %v38
    %v47 = vmul.f32 %v45, 2.0
    %v48 = vmul.f32 %v44, 2.0
    %v49 = vmul.f32 %v43, 2.0
    %v50 = vmul.f32 %v46, 2.0
    %v51 = vadd.f32 %v37, %v47
    %v52 = vadd.f32 %v36, %v48
    %v53 = vadd.f32 %v35, %v49
    %v54 = vadd.f32 %v34, %v50
    %55 = vst [vmem:[#allocation5] sm:$0xff] %v51
    %56 = vst [vmem:[#allocation5 + $0x8] sm:$0xff] %v52
    %57 = vst [vmem:[#allocation5 + $0x10] sm:$0xff] %v53
    %58 = vst [vmem:[#allocation5 + $0x18] sm:$0xff] %v54
    // Predicated region
    $region10: #{tpu_custom_call.1} parent=1 // pred_check
      _
    $region11: #{tpu_custom_call.1} parent=1 // pred_check_branch
      %60 = sbr.rel (0) target = $region13
    $region12: #{tpu_custom_call.1} parent=1 // pred_region
      %s62 = ssub.s32 512, 512
      %63 = vsyncadd [#allocation4], %s62
      %s64 = sshll.u32 [#allocation5], 4
      %s65 = int_to_ptr.vmem [resolvable:$true] %s64
      %70 = dma.vmem_to_hbm [thread:$0]  %s65, 512, %s1, [#allocation4], 128, 128, 8
    $region13: #{tpu_custom_call.1} parent=1 // pred_fallthru
      _
    // Predicated region
    $region14: #{tpu_custom_call.1} parent=1 // pred_check
      _
    $region15: #{tpu_custom_call.1} parent=1 // pred_check_branch
      %72 = sbr.rel (0) target = $region17
    $region16: #{tpu_custom_call.1} parent=1 // pred_region
      %73 = dma.done [#allocation4], 512
    $region17: #{tpu_custom_call.1} parent=1 // pred_fallthru
      _
    %74 = vsyncpa [#allocation3], 1
    %75 = vsyncpa [#allocation4], 1

// kernel: tpu_custom_call.1
$region0: #{tpu_custom_call.1}
  #allocation0 [shape = 'u32[]', space=smem, size = 0x4, offset = 0x4, fixed_abs, tag = 'smem constant byte address 0x4 - core index']
  #allocation1 [shape = 'u32[144,128]{1,0:T(1,128)}', space=vmem, size = 0x12000, scoped, tag = 'internal scratch']
  %s0 = inlined_call_operand.hbm [shape: f32[32,128], index: 0, kind: input, shape index: {}]
  %s1 = inlined_call_operand.hbm [shape: f32[32,128], index: 1, kind: output, shape index: {}]
  %s2 = sld [smem:[#allocation0]]
  $region18: #{tpu_custom_call.1} parent=0
    _
  %s4 = ssub.s32 1, %s2
  %s5 = scalar_select 0, %s4, %s2
  $region1: #{tpu_custom_call.1} parent=0
    #allocation2 [shape = 'u8[16384]{0}', space=vmem, size = 0x4000, scoped, tag = 'input window, operand 0, single buffered']
    #allocation3 [shape = 's32[1]{0}', space=sflag, size = 0x4, scoped, tag = 'scoped memory for tpu_custom_call.1']
    #allocation4 [shape = 's32[1]{0}', space=sflag, size = 0x4, scoped, tag = 'scoped memory for tpu_custom_call.1']
    #allocation5 [shape = 'u8[16384]{0}', space=vmem, size = 0x4000, scoped, tag = 'output window, operand 0, single buffered']
    %6 = vsyncpa [#allocation3], 0
    %7 = vsyncpa [#allocation4], 0
    // Predicated region
    $region2: #{tpu_custom_call.1} parent=1 // pred_check
      _
    $region3: #{tpu_custom_call.1} parent=1 // pred_check_branch
      %9 = sbr.rel (0) target = $region5
    $region4: #{tpu_custom_call.1} parent=1 // pred_region
      %s11 = ssub.s32 512, 512
      %12 = vsyncadd [#allocation3], %s11
      %s13 = sshll.u32 [#allocation2], 4
      %s14 = int_to_ptr.vmem [resolvable:$true] %s13
      %19 = dma.hbm_to_vmem [thread:$0]  %s0, 512, %s14, [#allocation3], 128, 128, 8
    $region5: #{tpu_custom_call.1} parent=1 // pred_fallthru
      _
    // Predicated region
    $region6: #{tpu_custom_call.1} parent=1 // pred_check
      _
    $region7: #{tpu_custom_call.1} parent=1 // pred_check_branch
      %21 = sbr.rel (0) target = $region9
    $region8: #{tpu_custom_call.1} parent=1 // pred_region
      %22 = dma.done [#allocation3], 512
    $region9: #{tpu_custom_call.1} parent=1 // pred_fallthru
      _
    %v23 = vld [vmem:[#allocation2] sm:$0xff]
    %v24 = vld [vmem:[#allocation2 + $0x8] sm:$0xff]
    %v25 = vld [vmem:[#allocation2 + $0x10] sm:$0xff]
    %v26 = vld [vmem:[#allocation2 + $0x18] sm:$0xff]
    %27 = vrot.lane.b32.xlu0 %v23, 1
    %v28 = vpop.permute.xlu0 %27
    %29 = vrot.lane.b32.xlu0 %v24, 1
    %v30 = vpop.permute.xlu0 %29
    %31 = vrot.lane.b32.xlu0 %v25, 1
    %v32 = vpop.permute.xlu0 %31
    %33 = vrot.lane.b32.xlu0 %v26, 1
    %v34 = vpop.permute.xlu0 %33
    %35 = vrot.lane.b32.xlu0 %v23, 127
    %v36 = vpop.permute.xlu0 %35
    %37 = vrot.lane.b32.xlu0 %v24, 127
    %v38 = vpop.permute.xlu0 %37
    %39 = vrot.lane.b32.xlu0 %v25, 127
    %v40 = vpop.permute.xlu0 %39
    %41 = vrot.lane.b32.xlu0 %v26, 127
    %v42 = vpop.permute.xlu0 %41
    %v43 = vmul.f32 %v36, 2.0
    %v44 = vmul.f32 %v38, 2.0
    %v45 = vmul.f32 %v40, 2.0
    %v46 = vmul.f32 %v42, 2.0
    %v47 = vadd.f32 %v28, %v43
    %v48 = vadd.f32 %v30, %v44
    %v49 = vadd.f32 %v32, %v45
    %v50 = vadd.f32 %v34, %v46
    %51 = vst [vmem:[#allocation5] sm:$0xff] %v47
    %52 = vst [vmem:[#allocation5 + $0x8] sm:$0xff] %v48
    %53 = vst [vmem:[#allocation5 + $0x10] sm:$0xff] %v49
    %54 = vst [vmem:[#allocation5 + $0x18] sm:$0xff] %v50
    // Predicated region
    $region10: #{tpu_custom_call.1} parent=1 // pred_check
      _
    $region11: #{tpu_custom_call.1} parent=1 // pred_check_branch
      %56 = sbr.rel (0) target = $region13
    $region12: #{tpu_custom_call.1} parent=1 // pred_region
      %s58 = ssub.s32 512, 512
      %59 = vsyncadd [#allocation4], %s58
      %s60 = sshll.u32 [#allocation5], 4
      %s61 = int_to_ptr.vmem [resolvable:$true] %s60
      %66 = dma.vmem_to_hbm [thread:$0]  %s61, 512, %s1, [#allocation4], 128, 128, 8
    $region13: #{tpu_custom_call.1} parent=1 // pred_fallthru
      _
    // Predicated region
    $region14: #{tpu_custom_call.1} parent=1 // pred_check
      _
    $region15: #{tpu_custom_call.1} parent=1 // pred_check_branch
      %68 = sbr.rel (0) target = $region17
    $region16: #{tpu_custom_call.1} parent=1 // pred_region
      %69 = dma.done [#allocation4], 512
    $region17: #{tpu_custom_call.1} parent=1 // pred_fallthru
      _
    %70 = vsyncpa [#allocation3], 1
    %71 = vsyncpa [#allocation4], 1

// kernel: tpu_custom_call.1
$region0: #{tpu_custom_call.1}
  #allocation0 [shape = 'u32[]', space=smem, size = 0x4, offset = 0x4, fixed_abs, tag = 'smem constant byte address 0x4 - core index']
  #allocation1 [shape = 'u32[144,128]{1,0:T(1,128)}', space=vmem, size = 0x12000, scoped, tag = 'internal scratch']
  %s0 = inlined_call_operand.hbm [shape: f32[64,128], index: 0, kind: input, shape index: {}]
  %s1 = inlined_call_operand.hbm [shape: f32[64,128], index: 1, kind: input, shape index: {}]
  %s2 = inlined_call_operand.hbm [shape: f32[2,8,128], index: 2, kind: output, shape index: {}]
  %s3 = sld [smem:[#allocation0]]
  $region49: #{tpu_custom_call.1} parent=0
    _
  %s5 = ssub.s32 1, %s3
  %s6 = scalar_select 0, %s5, %s3
  $region1: #{tpu_custom_call.1} parent=0
    #allocation2 [shape = 'u8[32768]{0}', space=vmem, size = 0x8000, scoped, tag = 'input window, operand 0']
    #allocation3 [shape = 's32[2]{0}', space=sflag, size = 0x8, scoped, tag = 'scoped memory for tpu_custom_call.1']
    #allocation4 [shape = 's32[2]{0}', space=sflag, size = 0x8, scoped, tag = 'scoped memory for tpu_custom_call.1']
    #allocation5 [shape = 'u8[32768]{0}', space=vmem, size = 0x8000, scoped, tag = 'input window, operand 1']
    #allocation6 [shape = 's32[2]{0}', space=sflag, size = 0x8, scoped, tag = 'scoped memory for tpu_custom_call.1']
    #allocation7 [shape = 'u8[8192]{0}', space=vmem, size = 0x2000, scoped, tag = 'output window, operand 0']
    %7 = vsyncpa [#allocation3], 0
    %s8 = scalar_lea.sflag [#allocation3], 1
    %9 = vsyncpa %s8, 0
    %10 = vsyncpa [#allocation6], 0
    %s11 = scalar_lea.sflag [#allocation6], 1
    %12 = vsyncpa %s11, 0
    %13 = vsyncpa [#allocation4], 0
    %s14 = scalar_lea.sflag [#allocation4], 1
    %15 = vsyncpa %s14, 0
    loop: start=0, step=1, limit=4
    $region2: #{tpu_custom_call.1} parent=1 // loop_pre_header
      _
    $region3: #{tpu_custom_call.1} parent=1 // loop_header
      %s17 = sphi 0, %s21
      %p18 = scmp.ge.s32.totalorder %s17, 4
      %s27 = sphi 0, %s29
      %s30 = sphi 0, %s27
      %s31 = sphi 0, %s30
      %s47 = sphi 0, %s31
      %s53 = sphi 0, %s55
      %s56 = sphi 0, %s53
      %s57 = sphi 0, %s56
      %s73 = sphi 0, %s57
      %s79 = sphi 0, %s81
      %s82 = sphi 0, %s79
      %s83 = sphi 0, %s82
      %s99 = sphi 0, %s83
    $region4: #{tpu_custom_call.1} parent=1 // loop_header_branch
      %20 = sbr.rel (%p18) target = $region8
    $region5: #{tpu_custom_call.1} parent=1 // loop_body
      %s22 = ssub.s32 %s17, 1
      %s23 = ssub.s32 %s17, 2
      %s24 = sadd.s32 %s17, 1
      %s25 = ssub.s32 %s17, %s24
      %p26 = scmp.eq.s32.totalorder %s25, 0
      %s28 = sadd.s32 %s27, 1
      %s29 = scalar_select %p26, %s27, %s28
      %p32 = pneg %p26
      %p33 = scmp.eq.s32.totalorder %s17, 1
      %p34 = por %p32, %p33
      %p35 = scmp.ne.s32.totalorder %s27, %s30
      %p36 = scmp.eq.s32.totalorder %s17, 0
      %p37 = por %p35, %p36
      %p38 = scmp.ne.s32.totalorder %s27, %s30
      %p39 = scmp.eq.s32.totalorder %s22, 1
      %p40 = por %p38, %p39
      %p41 = scmp.ne.s32.totalorder %s30, %s31
      %p42 = scmp.eq.s32.totalorder %s22, 0
      %p43 = por %p41, %p42
      %p44 = scmp.ne.s32.totalorder %s30, %s31
      %p45 = scmp.eq.s32.totalorder %s23, 1
      %p46 = por %p44, %p45
      %p48 = scmp.ne.s32.totalorder %s31, %s47
      %p49 = scmp.eq.s32.totalorder %s23, 0
      %p50 = por %p48, %p49
      %s51 = ssub.s32 %s17, %s24
      %p52 = scmp.eq.s32.totalorder %s51, 0
      %s54 = sadd.s32 %s53, 1
      %s55 = scalar_select %p52, %s53, %s54
      %p58 = pneg %p52
      %p59 = scmp.eq.s32.totalorder %s17, 1
      %p60 = por %p58, %p59
      %p61 = scmp.ne.s32.totalorder %s53, %s56
      %p62 = scmp.eq.s32.totalorder %s17, 0
      %p63 = por %p61, %p62
      %p64 = scmp.ne.s32.totalorder %s53, %s56
      %p65 = scmp.eq.s32.totalorder %s22, 1
      %p66 = por %p64, %p65
      %p67 = scmp.ne.s32.totalorder %s56, %s57
      %p68 = scmp.eq.s32.totalorder %s22, 0
      %p69 = por %p67, %p68
      %p70 = scmp.ne.s32.totalorder %s56, %s57
      %p71 = scmp.eq.s32.totalorder %s23, 1
      %p72 = por %p70, %p71
      %p74 = scmp.ne.s32.totalorder %s57, %s73
      %p75 = scmp.eq.s32.totalorder %s23, 0
      %p76 = por %p74, %p75
      %s77 = ssub.s32 %s17, %s24
      %p78 = scmp.eq.s32.totalorder %s77, 0
      %s80 = sadd.s32 %s79, 1
      %s81 = scalar_select %p78, %s79, %s80
      %p84 = pneg %p78
      %p85 = scmp.eq.s32.totalorder %s17, 1
      %p86 = por %p84, %p85
      %p87 = scmp.ne.s32.totalorder %s79, %s82
      %p88 = scmp.eq.s32.totalorder %s17, 0
      %p89 = por %p87, %p88
      %p90 = scmp.ne.s32.totalorder %s79, %s82
      %p91 = scmp.eq.s32.totalorder %s22, 1
      %p92 = por %p90, %p91
      %p93 = scmp.ne.s32.totalorder %s82, %s83
      %p94 = scmp.eq.s32.totalorder %s22, 0
      %p95 = por %p93, %p94
      %p96 = scmp.ne.s32.totalorder %s82, %s83
      %p97 = scmp.eq.s32.totalorder %s23, 1
      %p98 = por %p96, %p97
      %p100 = scmp.ne.s32.totalorder %s83, %s99
      %p101 = scmp.eq.s32.totalorder %s23, 0
      %p102 = por %p100, %p101
      %p103 = scmp.le.s32.totalorder 1, %s17
      %p104 = scmp.lt.s32.totalorder %s17, 3
      %p105 = pnand %p103, %p104
      %p106 = pneg %p105
      // Predicated region
      $region9: #{tpu_custom_call.1} parent=5 // pred_check
        _
      $region10: #{tpu_custom_call.1} parent=5 // pred_check_branch
        %108 = sbr.rel (%p105) target = $region12
      $region11: #{tpu_custom_call.1} parent=5 // pred_region
        %s109 = ssub.s32 %s17, 1
      $region12: #{tpu_custom_call.1} parent=5 // pred_fallthru
        _
      %p110 = scmp.lt.s32.totalorder %s17, 2
      // Predicated region
      $region13: #{tpu_custom_call.1} parent=5 // pred_check
        %p111 = pneg %p110
      $region14: #{tpu_custom_call.1} parent=5 // pred_check_branch
        %113 = sbr.rel (%p111) target = $region16
      $region15: #{tpu_custom_call.1} parent=5 // pred_region
        // Predicated region
        $region17: #{tpu_custom_call.1} parent=15 // pred_check
          %p114 = pneg %p37
        $region18: #{tpu_custom_call.1} parent=15 // pred_check_branch
          %116 = sbr.rel (%p114) target = $region20
        $region19: #{tpu_custom_call.1} parent=15 // pred_region
          %s117 = sand.u32 %s27, 1
          %s118 = scalar_lea.sflag [#allocation3], %s117
          %s119 = sand.u32 %s27, 1
          %s120 = smul.addr %s119, 32
          %s121 = scalar_lea.vmem [#allocation2], %s120
          %s122 = smul.u32 4, %s17
          %s124 = ssub.s32 512, 512
          %125 = vsyncadd %s118, %s124
          %s126 = smul.addr %s122, 128
          %s127 = scalar_lea.hbm %s0, %s126
          %s128 = sshll.u32 %s121, 4
          %s129 = int_to_ptr.vmem [resolvable:$true] %s128
          %134 = dma.hbm_to_vmem [thread:$0]  %s127, 512, %s129, %s118, 128, 128, 8
        $region20: #{tpu_custom_call.1} parent=15 // pred_fallthru
          _
        // Predicated region
        $region21: #{tpu_custom_call.1} parent=15 // pred_check
          %p135 = pneg %p63
        $region22: #{tpu_custom_call.1} parent=15 // pred_check_branch
          %137 = sbr.rel (%p135) target = $region24
        $region23: #{tpu_custom_call.1} parent=15 // pred_region
          %s138 = sand.u32 %s53, 1
          %s139 = scalar_lea.sflag [#allocation6], %s138
          %s140 = sand.u32 %s53, 1
          %s141 = smul.addr %s140, 32
          %s142 = scalar_lea.vmem [#allocation5], %s141
          %s143 = smul.u32 4, %s17
          %s145 = ssub.s32 512, 512
          %146 = vsyncadd %s139, %s145
          %s147 = smul.addr %s143, 128
          %s148 = scalar_lea.hbm %s1, %s147
          %s149 = sshll.u32 %s142, 4
          %s150 = int_to_ptr.vmem [resolvable:$true] %s149
          %155 = dma.hbm_to_vmem [thread:$0]  %s148, 512, %s150, %s139, 128, 128, 8
        $region24: #{tpu_custom_call.1} parent=15 // pred_fallthru
          _
      $region16: #{tpu_custom_call.1} parent=5 // pred_fallthru
        _
      %p156 = scmp.le.s32.totalorder 1, %s17
      %p157 = scmp.lt.s32.totalorder %s17, 3
      %p158 = pnand %p156, %p157
      %p159 = pneg %p158
      // Predicated region
      $region25: #{tpu_custom_call.1} parent=5 // pred_check
        _
      $region26: #{tpu_custom_call.1} parent=5 // pred_check_branch
        %161 = sbr.rel (%p158) target = $region28
      $region27: #{tpu_custom_call.1} parent=5 // pred_region
        %s162 = ssub.s32 %s17, 1
        %s163 = sand.u32 %s30, 1
        %s164 = scalar_lea.sflag [#allocation3], %s163
        %s165 = sand.u32 %s30, 1
        %s166 = smul.addr %s165, 32
        %s167 = scalar_lea.vmem [#allocation2], %s166
        // Predicated region
        $region29: #{tpu_custom_call.1} parent=27 // pred_check
          %p168 = pneg %p43
        $region30: #{tpu_custom_call.1} parent=27 // pred_check_branch
          %170 = sbr.rel (%p168) target = $region32
        $region31: #{tpu_custom_call.1} parent=27 // pred_region
          %171 = dma.done %s164, 512
        $region32: #{tpu_custom_call.1} parent=27 // pred_fallthru
          _
        %s172 = sand.u32 %s56, 1
        %s173 = scalar_lea.sflag [#allocation6], %s172
        %s174 = sand.u32 %s56, 1
        %s175 = smul.addr %s174, 32
        %s176 = scalar_lea.vmem [#allocation5], %s175
        // Predicated region
        $region33: #{tpu_custom_call.1} parent=27 // pred_check
          %p177 = pneg %p69
        $region34: #{tpu_custom_call.1} parent=27 // pred_check_branch
          %179 = sbr.rel (%p177) target = $region36
        $region35: #{tpu_custom_call.1} parent=27 // pred_region
          %180 = dma.done %s173, 512
        $region36: #{tpu_custom_call.1} parent=27 // pred_fallthru
          _
        %s181 = sand.u32 %s30, 1
        %s182 = scalar_lea.sflag [#allocation3], %s181
        %s183 = sand.u32 %s30, 1
        %s184 = smul.addr %s183, 32
        %s185 = scalar_lea.vmem [#allocation2], %s184
        %p186 = pneg %p43
        %p187 = pneg %p40
        %s188 = sand.u32 %s56, 1
        %s189 = scalar_lea.sflag [#allocation6], %s188
        %s190 = sand.u32 %s56, 1
        %s191 = smul.addr %s190, 32
        %s192 = scalar_lea.vmem [#allocation5], %s191
        %p193 = pneg %p69
        %p194 = pneg %p66
        %p195 = pneg %p95
        %p196 = pneg %p92
        %s197 = sand.u32 %s82, 1
        %s198 = scalar_lea.sflag [#allocation4], %s197
        %s199 = sand.u32 %s82, 1
        %s200 = smul.addr %s199, 8
        %s201 = scalar_lea.vmem [#allocation7], %s200
        %s202 = smul.u32 4, %s22
        %s203 = smul.u32 4, %s22
        %v204 = vld [vmem:[%s167] sm:$0xff]
        %v205 = vld [vmem:[%s167 + $0x8] sm:$0xff]
        %v206 = vld [vmem:[%s167 + $0x10] sm:$0xff]
        %v207 = vld [vmem:[%s167 + $0x18] sm:$0xff]
        %v208 = vld [vmem:[%s176] sm:$0xff]
        %v209 = vld [vmem:[%s176 + $0x8] sm:$0xff]
        %v210 = vld [vmem:[%s176 + $0x10] sm:$0xff]
        %v211 = vld [vmem:[%s176 + $0x18] sm:$0xff]
        %v212 = vlaneseq
        %v213 = vshrl.u32 %v212, 7
        %v214 = vadd.s32 %v213, 8
        %v215 = vadd.s32 %v213, 16
        %v216 = vadd.s32 %v213, 24
        %v217 = vlaneseq
        %v218 = vand.u32 %v217, 127
        %v219 = vand.u32 %v213, 15
        %v220 = vand.u32 %v214, 15
        %v221 = vand.u32 %v215, 15
        %v222 = vand.u32 %v216, 15
        %vm223 = vcmp.eq.s32.totalorder %v219, 0
        %vm224 = vcmp.eq.s32.totalorder %v220, 0
        %vm225 = vcmp.eq.s32.totalorder %v221, 0
        %vm226 = vcmp.eq.s32.totalorder %v222, 0
        %vm227 = vcmp.eq.s32.totalorder %v219, 15
        %vm228 = vcmp.eq.s32.totalorder %v220, 15
        %vm229 = vcmp.eq.s32.totalorder %v221, 15
        %vm230 = vcmp.eq.s32.totalorder %v222, 15
        %vm231 = vcmp.eq.s32.totalorder %v218, 0
        %vm232 = vcmp.eq.s32.totalorder %v218, 127
        %v234 = vrot.slane %v211, 7
        %vm239 = vcmask 1040384
        %v240 = vrot.slane %v208, 7
        %v241 = vrot.slane %v209, 7
        %v242 = vsel %vm239, %v240, %v241
        %v243 = vrot.slane %v210, 7
        %v244 = vsel %vm239, %v241, %v243
        %v245 = vsel %vm239, %v243, %v234
        %v250 = vsel %vm239, %v234, %v240
        %v251 = vsel %vm223, %v208, %v250
        %v252 = vsel %vm224, %v209, %v242
        %v253 = vsel %vm225, %v210, %v244
        %v254 = vsel %vm226, %v211, %v245
        %vm255 = vcmask 1046528
        %v256 = vrot.slane %v208, 1
        %v257 = vrot.slane %v209, 1
        %v258 = vsel %vm255, %v256, %v257
        %v259 = vrot.slane %v210, 1
        %v260 = vsel %vm255, %v257, %v259
        %v261 = vrot.slane %v211, 1
        %v262 = vsel %vm255, %v259, %v261
        %v268 = vsel %vm255, %v261, %v256
        %v269 = vsel %vm227, %v208, %v258
        %v270 = vsel %vm228, %v209, %v260
        %v271 = vsel %vm229, %v210, %v262
        %v272 = vsel %vm230, %v211, %v268
        %273 = vrot.lane.b32.xlu0 %v208, 1
        %v274 = vpop.permute.xlu0 %273
        %275 = vrot.lane.b32.xlu0 %v209, 1
        %v276 = vpop.permute.xlu0 %275
        %277 = vrot.lane.b32.xlu0 %v210, 1
        %v278 = vpop.permute.xlu0 %277
        %279 = vrot.lane.b32.xlu0 %v211, 1
        %v280 = vpop.permute.xlu0 %279
        %v285 = vsel %vm231, %v208, %v274
        %v286 = vsel %vm231, %v209, %v276
        %v287 = vsel %vm231, %v210, %v278
        %v288 = vsel %vm231, %v211, %v280
        %289 = vrot.lane.b32.xlu0 %v208, 127
        %v290 = vpop.permute.xlu0 %289
        %291 = vrot.lane.b32.xlu0 %v209, 127
        %v292 = vpop.permute.xlu0 %291
        %293 = vrot.lane.b32.xlu0 %v210, 127
        %v294 = vpop.permute.xlu0 %293
        %295 = vrot.lane.b32.xlu0 %v211, 127
        %v296 = vpop.permute.xlu0 %295
        %v301 = vsel %vm232, %v208, %v290
        %v302 = vsel %vm232, %v209, %v292
        %v303 = vsel %vm232, %v210, %v294
        %v304 = vsel %vm232, %v211, %v296
        %v305 = vmul.f32 %v208, 2.0
        %v306 = vmul.f32 %v209, 2.0
        %v307 = vmul.f32 %v210, 2.0
        %v308 = vmul.f32 %v211, 2.0
        %v309 = vadd.f32 %v251, %v305
        %v310 = vadd.f32 %v252, %v306
        %v311 = vadd.f32 %v253, %v307
        %v312 = vadd.f32 %v254, %v308
        %v313 = vadd.f32 %v309, %v269
        %v314 = vadd.f32 %v310, %v270
        %v315 = vadd.f32 %v311, %v271
        %v316 = vadd.f32 %v312, %v272
        %v317 = vadd.f32 %v285, %v305
        %v318 = vadd.f32 %v286, %v306
        %v319 = vadd.f32 %v287, %v307
        %v320 = vadd.f32 %v288, %v308
        %v321 = vadd.f32 %v317, %v301
        %v322 = vadd.f32 %v318, %v302
        %v323 = vadd.f32 %v319, %v303
        %v324 = vadd.f32 %v320, %v304
        %329 = vrot.lane.b32.xlu0 %v313, 1
        %v330 = vpop.permute.xlu0 %329
        %331 = vrot.lane.b32.xlu0 %v314, 1
        %v332 = vpop.permute.xlu0 %331
        %333 = vrot.lane.b32.xlu0 %v315, 1
        %v334 = vpop.permute.xlu0 %333
        %335 = vrot.lane.b32.xlu0 %v316, 1
        %v336 = vpop.permute.xlu0 %335
        %v341 = vsel %vm231, %v313, %v330
        %v342 = vsel %vm231, %v314, %v332
        %v343 = vsel %vm231, %v315, %v334
        %v344 = vsel %vm231, %v316, %v336
        %345 = vrot.lane.b32.xlu0 %v313, 127
        %v346 = vpop.permute.xlu0 %345
        %347 = vrot.lane.b32.xlu0 %v314, 127
        %v348 = vpop.permute.xlu0 %347
        %349 = vrot.lane.b32.xlu0 %v315, 127
        %v350 = vpop.permute.xlu0 %349
        %351 = vrot.lane.b32.xlu0 %v316, 127
        %v352 = vpop.permute.xlu0 %351
        %v357 = vsel %vm232, %v313, %v346
        %v358 = vsel %vm232, %v314, %v348
        %v359 = vsel %vm232, %v315, %v350
        %v360 = vsel %vm232, %v316, %v352
        %v362 = vrot.slane %v324, 7
        %v367 = vrot.slane %v321, 7
        %v368 = vrot.slane %v322, 7
        %v369 = vsel %vm239, %v367, %v368
        %v370 = vrot.slane %v323, 7
        %v371 = vsel %vm239, %v368, %v370
        %v372 = vsel %vm239, %v370, %v362
        %v377 = vsel %vm239, %v362, %v367
        %v378 = vsel %vm223, %v321, %v377
        %v379 = vsel %vm224, %v322, %v369
        %v380 = vsel %vm225, %v323, %v371
        %v381 = vsel %vm226, %v324, %v372
        %v382 = vrot.slane %v321, 1
        %v383 = vrot.slane %v322, 1
        %v384 = vsel %vm255, %v382, %v383
        %v385 = vrot.slane %v323, 1
        %v386 = vsel %vm255, %v383, %v385
        %v387 = vrot.slane %v324, 1
        %v388 = vsel %vm255, %v385, %v387
        %v394 = vsel %vm255, %v387, %v382
        %v395 = vsel %vm227, %v321, %v384
        %v396 = vsel %vm228, %v322, %v386
        %v397 = vsel %vm229, %v323, %v388
        %v398 = vsel %vm230, %v324, %v394
        %v399 = vsub.f32 %v357, %v341
        %v400 = vsub.f32 %v358, %v342
        %v401 = vsub.f32 %v359, %v343
        %v402 = vsub.f32 %v360, %v344
        %v403 = vsub.f32 %v395, %v378
        %v404 = vsub.f32 %v396, %v379
        %v405 = vsub.f32 %v397, %v380
        %v406 = vsub.f32 %v398, %v381
        %v407 = vmul.f32 %v399, %v399
        %v408 = vmul.f32 %v400, %v400
        %v409 = vmul.f32 %v401, %v401
        %v410 = vmul.f32 %v402, %v402
        %v411 = vmul.f32 %v403, %v403
        %v412 = vmul.f32 %v404, %v404
        %v413 = vmul.f32 %v405, %v405
        %v414 = vmul.f32 %v406, %v406
        %v415 = vadd.f32 %v407, %v411
        %v416 = vadd.f32 %v408, %v412
        %v417 = vadd.f32 %v409, %v413
        %v418 = vadd.f32 %v410, %v414
        %v419 = vadd.f32 %v415, 6.4e-05
        %v420 = vadd.f32 %v416, 6.4e-05
        %v421 = vadd.f32 %v417, 6.4e-05
        %v422 = vadd.f32 %v418, 6.4e-05
        %v423 = vrsqrt.pop %v419
        %v424 = vmul.f32 %v419, %v423
        %vm425 = vcmp.eq.f32.partialorder %v419, inf
        %v426 = vsel %vm425, %v419, %v424
        %vm427 = vcmp.eq.f32.partialorder %v419, 0.0
        %v428 = vand.u32 %v419, 2147483648
        %v429 = vsel %vm427, %v428, %v426
        %v430 = vrsqrt.pop %v420
        %v431 = vmul.f32 %v420, %v430
        %vm432 = vcmp.eq.f32.partialorder %v420, inf
        %v433 = vsel %vm432, %v420, %v431
        %vm434 = vcmp.eq.f32.partialorder %v420, 0.0
        %v435 = vand.u32 %v420, 2147483648
        %v436 = vsel %vm434, %v435, %v433
        %v437 = vrsqrt.pop %v421
        %v438 = vmul.f32 %v421, %v437
        %vm439 = vcmp.eq.f32.partialorder %v421, inf
        %v440 = vsel %vm439, %v421, %v438
        %vm441 = vcmp.eq.f32.partialorder %v421, 0.0
        %v442 = vand.u32 %v421, 2147483648
        %v443 = vsel %vm441, %v442, %v440
        %v444 = vrsqrt.pop %v422
        %v445 = vmul.f32 %v422, %v444
        %vm446 = vcmp.eq.f32.partialorder %v422, inf
        %v447 = vsel %vm446, %v422, %v445
        %vm448 = vcmp.eq.f32.partialorder %v422, 0.0
        %v449 = vand.u32 %v422, 2147483648
        %v450 = vsel %vm448, %v449, %v447
        %v452 = vrot.slane %v207, 7
        %v457 = vrot.slane %v204, 7
        %v458 = vrot.slane %v205, 7
        %v459 = vsel %vm239, %v457, %v458
        %v460 = vrot.slane %v206, 7
        %v461 = vsel %vm239, %v458, %v460
        %v462 = vsel %vm239, %v460, %v452
        %v467 = vsel %vm239, %v452, %v457
        %v468 = vsel %vm223, %v204, %v467
        %v469 = vsel %vm224, %v205, %v459
        %v470 = vsel %vm225, %v206, %v461
        %v471 = vsel %vm226, %v207, %v462
        %v472 = vrot.slane %v204, 1
        %v473 = vrot.slane %v205, 1
        %v474 = vsel %vm255, %v472, %v473
        %v475 = vrot.slane %v206, 1
        %v476 = vsel %vm255, %v473, %v475
        %v477 = vrot.slane %v207, 1
        %v478 = vsel %vm255, %v475, %v477
        %v484 = vsel %vm255, %v477, %v472
        %v485 = vsel %vm227, %v204, %v474
        %v486 = vsel %vm228, %v205, %v476
        %v487 = vsel %vm229, %v206, %v478
        %v488 = vsel %vm230, %v207, %v484
        %489 = vrot.lane.b32.xlu0 %v204, 1
        %v490 = vpop.permute.xlu0 %489
        %491 = vrot.lane.b32.xlu0 %v205, 1
        %v492 = vpop.permute.xlu0 %491
        %493 = vrot.lane.b32.xlu0 %v206, 1
        %v494 = vpop.permute.xlu0 %493
        %495 = vrot.lane.b32.xlu0 %v207, 1
        %v496 = vpop.permute.xlu0 %495
        %v501 = vsel %vm231, %v204, %v490
        %v502 = vsel %vm231, %v205, %v492
        %v503 = vsel %vm231, %v206, %v494
        %v504 = vsel %vm231, %v207, %v496
        %505 = vrot.lane.b32.xlu0 %v204, 127
        %v506 = vpop.permute.xlu0 %505
        %507 = vrot.lane.b32.xlu0 %v205, 127
        %v508 = vpop.permute.xlu0 %507
        %509 = vrot.lane.b32.xlu0 %v206, 127
        %v510 = vpop.permute.xlu0 %509
        %511 = vrot.lane.b32.xlu0 %v207, 127
        %v512 = vpop.permute.xlu0 %511
        %v517 = vsel %vm232, %v204, %v506
        %v518 = vsel %vm232, %v205, %v508
        %v519 = vsel %vm232, %v206, %v510
        %v520 = vsel %vm232, %v207, %v512
        %v521 = vmul.f32 %v204, 2.0
        %v522 = vmul.f32 %v205, 2.0
        %v523 = vmul.f32 %v206, 2.0
        %v524 = vmul.f32 %v207, 2.0
        %v525 = vadd.f32 %v468, %v521
        %v526 = vadd.f32 %v469, %v522
        %v527 = vadd.f32 %v470, %v523
        %v528 = vadd.f32 %v471, %v524
        %v529 = vadd.f32 %v525, %v485
        %v530 = vadd.f32 %v526, %v486
        %v531 = vadd.f32 %v527, %v487
        %v532 = vadd.f32 %v528, %v488
        %v533 = vadd.f32 %v501, %v521
        %v534 = vadd.f32 %v502, %v522
        %v535 = vadd.f32 %v503, %v523
        %v536 = vadd.f32 %v504, %v524
        %v537 = vadd.f32 %v533, %v517
        %v538 = vadd.f32 %v534, %v518
        %v539 = vadd.f32 %v535, %v519
        %v540 = vadd.f32 %v536, %v520
        %545 = vrot.lane.b32.xlu0 %v529, 1
        %v546 = vpop.permute.xlu0 %545
        %547 = vrot.lane.b32.xlu0 %v530, 1
        %v548 = vpop.permute.xlu0 %547
        %549 = vrot.lane.b32.xlu0 %v531, 1
        %v550 = vpop.permute.xlu0 %549
        %551 = vrot.lane.b32.xlu0 %v532, 1
        %v552 = vpop.permute.xlu0 %551
        %v557 = vsel %vm231, %v529, %v546
        %v558 = vsel %vm231, %v530, %v548
        %v559 = vsel %vm231, %v531, %v550
        %v560 = vsel %vm231, %v532, %v552
        %561 = vrot.lane.b32.xlu0 %v529, 127
        %v562 = vpop.permute.xlu0 %561
        %563 = vrot.lane.b32.xlu0 %v530, 127
        %v564 = vpop.permute.xlu0 %563
        %565 = vrot.lane.b32.xlu0 %v531, 127
        %v566 = vpop.permute.xlu0 %565
        %567 = vrot.lane.b32.xlu0 %v532, 127
        %v568 = vpop.permute.xlu0 %567
        %v573 = vsel %vm232, %v529, %v562
        %v574 = vsel %vm232, %v530, %v564
        %v575 = vsel %vm232, %v531, %v566
        %v576 = vsel %vm232, %v532, %v568
        %v578 = vrot.slane %v540, 7
        %v583 = vrot.slane %v537, 7
        %v584 = vrot.slane %v538, 7
        %v585 = vsel %vm239, %v583, %v584
        %v586 = vrot.slane %v539, 7
        %v587 = vsel %vm239, %v584, %v586
        %v588 = vsel %vm239, %v586, %v578
        %v593 = vsel %vm239, %v578, %v583
        %v594 = vsel %vm223, %v537, %v593
        %v595 = vsel %vm224, %v538, %v585
        %v596 = vsel %vm225, %v539, %v587
        %v597 = vsel %vm226, %v540, %v588
        %v598 = vrot.slane %v537, 1
        %v599 = vrot.slane %v538, 1
        %v600 = vsel %vm255, %v598, %v599
        %v601 = vrot.slane %v539, 1
        %v602 = vsel %vm255, %v599, %v601
        %v603 = vrot.slane %v540, 1
        %v604 = vsel %vm255, %v601, %v603
        %v610 = vsel %vm255, %v603, %v598
        %v611 = vsel %vm227, %v537, %v600
        %v612 = vsel %vm228, %v538, %v602
        %v613 = vsel %vm229, %v539, %v604
        %v614 = vsel %vm230, %v540, %v610
        %v615 = vsub.f32 %v573, %v557
        %v616 = vsub.f32 %v574, %v558
        %v617 = vsub.f32 %v575, %v559
        %v618 = vsub.f32 %v576, %v560
        %v619 = vsub.f32 %v611, %v594
        %v620 = vsub.f32 %v612, %v595
        %v621 = vsub.f32 %v613, %v596
        %v622 = vsub.f32 %v614, %v597
        %v623 = vmul.f32 %v615, %v615
        %v624 = vmul.f32 %v616, %v616
        %v625 = vmul.f32 %v617, %v617
        %v626 = vmul.f32 %v618, %v618
        %v627 = vmul.f32 %v619, %v619
        %v628 = vmul.f32 %v620, %v620
        %v629 = vmul.f32 %v621, %v621
        %v630 = vmul.f32 %v622, %v622
        %v631 = vadd.f32 %v623, %v627
        %v632 = vadd.f32 %v624, %v628
        %v633 = vadd.f32 %v625, %v629
        %v634 = vadd.f32 %v626, %v630
        %v635 = vadd.f32 %v631, 6.4e-05
        %v636 = vadd.f32 %v632, 6.4e-05
        %v637 = vadd.f32 %v633, 6.4e-05
        %v638 = vadd.f32 %v634, 6.4e-05
        %v639 = vrsqrt.pop %v635
        %v640 = vmul.f32 %v635, %v639
        %vm641 = vcmp.eq.f32.partialorder %v635, inf
        %v642 = vsel %vm641, %v635, %v640
        %vm643 = vcmp.eq.f32.partialorder %v635, 0.0
        %v644 = vand.u32 %v635, 2147483648
        %v645 = vsel %vm643, %v644, %v642
        %v646 = vrsqrt.pop %v636
        %v647 = vmul.f32 %v636, %v646
        %vm648 = vcmp.eq.f32.partialorder %v636, inf
        %v649 = vsel %vm648, %v636, %v647
        %vm650 = vcmp.eq.f32.partialorder %v636, 0.0
        %v651 = vand.u32 %v636, 2147483648
        %v652 = vsel %vm650, %v651, %v649
        %v653 = vrsqrt.pop %v637
        %v654 = vmul.f32 %v637, %v653
        %vm655 = vcmp.eq.f32.partialorder %v637, inf
        %v656 = vsel %vm655, %v637, %v654
        %vm657 = vcmp.eq.f32.partialorder %v637, 0.0
        %v658 = vand.u32 %v637, 2147483648
        %v659 = vsel %vm657, %v658, %v656
        %v660 = vrsqrt.pop %v638
        %v661 = vmul.f32 %v638, %v660
        %vm662 = vcmp.eq.f32.partialorder %v638, inf
        %v663 = vsel %vm662, %v638, %v661
        %vm664 = vcmp.eq.f32.partialorder %v638, 0.0
        %v665 = vand.u32 %v638, 2147483648
        %v666 = vsel %vm664, %v665, %v663
        %v667 = vsub.f32 %v204, %v208
        %v668 = vsub.f32 %v205, %v209
        %v669 = vsub.f32 %v206, %v210
        %v670 = vsub.f32 %v207, %v211
        %v671 = vand.u32 2147483647, %v667
        %v672 = vand.u32 2147483647, %v668
        %v673 = vand.u32 2147483647, %v669
        %v674 = vand.u32 2147483647, %v670
        %v675 = vadd.f32 %v671, %v672
        %v676 = vadd.f32 %v675, %v673
        %v677 = vadd.f32 %v676, %v674
        %678 = vadd.xlane.f32.xlu0 %v677
        %v679 = vpop.xlane.xlu0 %678
        %v680 = vrot.slane %v679, 4
        %v681 = vadd.f32 %v679, %v680
        %v682 = vrot.slane %v681, 2
        %v683 = vadd.f32 %v681, %v682
        %v684 = vrot.slane %v683, 1
        %v685 = vadd.f32 %v683, %v684
        %s686 = vtos %v685
        %v687 = vsub.f32 %v645, %v429
        %v688 = vsub.f32 %v652, %v436
        %v689 = vsub.f32 %v659, %v443
        %v690 = vsub.f32 %v666, %v450
        %v691 = vand.u32 2147483647, %v687
        %v692 = vand.u32 2147483647, %v688
        %v693 = vand.u32 2147483647, %v689
        %v694 = vand.u32 2147483647, %v690
        %v695 = vadd.f32 %v691, %v692
        %v696 = vadd.f32 %v695, %v693
        %v697 = vadd.f32 %v696, %v694
        %698 = vadd.xlane.f32.xlu0 %v697
        %v699 = vpop.xlane.xlu0 %698
        %v700 = vrot.slane %v699, 4
        %v701 = vadd.f32 %v699, %v700
        %v702 = vrot.slane %v701, 2
        %v703 = vadd.f32 %v701, %v702
        %v704 = vrot.slane %v703, 1
        %v705 = vadd.f32 %v703, %v704
        %s706 = vtos %v705
        %s707 = smul.f32 %s706, 0.125
        %v708 = vstv %s686
        %v709 = vsel %vm231, %v708, 0.0
        %v710 = vadd.f32 %v709, 0.0
        %vm711 = vcmp.eq.s32.totalorder %v218, 1
        %v712 = vstv %s707
        %v713 = vsel %vm711, %v712, 0.0
        %v714 = vadd.f32 %v710, %v713
        %715 = vst [vmem:[%s201] sm:$0xff] %v714
        %s716 = sand.u32 %s82, 1
        %s717 = scalar_lea.sflag [#allocation4], %s716
        %s718 = sand.u32 %s82, 1
        %s719 = smul.addr %s718, 8
        %s720 = scalar_lea.vmem [#allocation7], %s719
        // Predicated region
        $region37: #{tpu_custom_call.1} parent=27 // pred_check
          %p721 = pneg %p92
        $region38: #{tpu_custom_call.1} parent=27 // pred_check_branch
          %723 = sbr.rel (%p721) target = $region40
        $region39: #{tpu_custom_call.1} parent=27 // pred_region
          %s725 = ssub.s32 128, 128
          %726 = vsyncadd %s717, %s725
          %s727 = smul.addr %s22, 128
          %s728 = scalar_lea.hbm %s2, %s727
          %s730 = sshll.u32 %s720, 4
          %s731 = int_to_ptr.vmem [resolvable:$true] %s730
          %733 = dma.vmem_to_hbm [thread:$0]  %s731, 128, %s728, %s717
        $region40: #{tpu_custom_call.1} parent=27 // pred_fallthru
          _
      $region28: #{tpu_custom_call.1} parent=5 // pred_fallthru
        _
      %p734 = scmp.le.s32.totalorder 2, %s17
      // Predicated region
      $region41: #{tpu_custom_call.1} parent=5 // pred_check
        %p735 = pneg %p734
      $region42: #{tpu_custom_call.1} parent=5 // pred_check_branch
        %737 = sbr.rel (%p735) target = $region44
      $region43: #{tpu_custom_call.1} parent=5 // pred_region
        %s738 = ssub.s32 %s17, 2
        // Predicated region
        $region45: #{tpu_custom_call.1} parent=43 // pred_check
          %p739 = pneg %p98
        $region46: #{tpu_custom_call.1} parent=43 // pred_check_branch
          %741 = sbr.rel (%p739) target = $region48
        $region47: #{tpu_custom_call.1} parent=43 // pred_region
          %s742 = sand.u32 %s83, 1
          %s743 = scalar_lea.sflag [#allocation4], %s742
          %s744 = sand.u32 %s83, 1
          %s745 = smul.addr %s744, 8
          %s746 = scalar_lea.vmem [#allocation7], %s745
          %747 = dma.done %s743, 128
        $region48: #{tpu_custom_call.1} parent=43 // pred_fallthru
          _
      $region44: #{tpu_custom_call.1} parent=5 // pred_fallthru
        _
    $region6: #{tpu_custom_call.1} parent=1 // loop_footer
      %s21 = sadd.s32 1, %s17
    $region7: #{tpu_custom_call.1} parent=1 // loop_footer_branch
      %16 = sbr.rel target = $region3
    $region8: #{tpu_custom_call.1} parent=1 // loop_exit
      _
    %748 = vsyncpa [#allocation3], 1
    %s749 = scalar_lea.sflag [#allocation3], 1
    %750 = vsyncpa %s749, 1
    %751 = vsyncpa [#allocation6], 1
    %s752 = scalar_lea.sflag [#allocation6], 1
    %753 = vsyncpa %s752, 1
    %754 = vsyncpa [#allocation4], 1
    %s755 = scalar_lea.sflag [#allocation4], 1
    %756 = vsyncpa %s755, 1

</llo_original>
